<compile_context>
chip_gen: v7x
topology: tpu7x:2x2x1
jax: 0.10.0
libtpu: 0.0.40
codegen_flags: <defaults>
</compile_context>

<pallas_src>
import jax
import jax.numpy as jnp
from jax.experimental import pallas as pl
from jax.experimental.pallas import tpu as pltpu


def egcn_kernel(emb_ref, adj_ref, w1_ref, w2_ref, out_ref):
    # adjacency is stored bf16 (exact for 0/1); upcast once for f32 matmuls.
    adj = adj_ref[...].astype(jnp.float32)                   # (Np, Np)

    # Degree / inverse-degree (guarded; padded rows have deg == 0).
    deg = jnp.sum(adj, axis=1, keepdims=True)                # (Np, 1)
    inv_deg = jnp.where(deg > 0.0, pl.reciprocal(deg), 0.0)  # EUP reciprocal

    e = emb_ref[...]                                         # (Np, Dp) f32

    # --- EGCL layer 1:  relu( (diag(1/deg) @ A @ e) @ W1 ) --------------
    pooled = jnp.dot(adj, e, preferred_element_type=jnp.float32) * inv_deg
    e = jnp.maximum(
        jnp.dot(pooled, w1_ref[...], preferred_element_type=jnp.float32), 0.0)

    # --- EGCL layer 2 ----------------------------------------------------
    pooled = jnp.dot(adj, e, preferred_element_type=jnp.float32) * inv_deg
    e = jnp.maximum(
        jnp.dot(pooled, w2_ref[...], preferred_element_type=jnp.float32), 0.0)

    out_ref[...] = e.astype(out_ref.dtype)


def egcn_forward(embeddings, adjacency, w1, w2):
    """Run the 2-layer EGCN.

    embeddings: (N, D) or (G, N, D); adjacency: (N, N) or (G, N, N).
    Returns the same leading layout as the inputs.
    """
    single = embeddings.ndim == 2
    if single:
        embeddings = embeddings[None]
        adjacency = adjacency[None]

    G, N, D = embeddings.shape
    assert adjacency.shape == (G, N, N)
    assert w1.shape == (D, D) and w2.shape == (D, D)

    # Pad node and feature dims to multiples of 128: the node dim is both the
    # lane dim of the adjacency and the K dim of A @ e, so lane-dense padding
    # gives fully dense vregs and MXU tiles.  Zero padding is exact: padded
    # embedding columns, weight rows/cols and adjacency rows/cols are zero,
    # and the inv_deg guard zeroes the padded rows.
    Dp = pl.cdiv(D, 128) * 128
    Np = pl.cdiv(N, 128) * 128

    f32 = jnp.float32
    bf16 = jnp.bfloat16
    emb_p = jnp.zeros((G, Np, Dp), f32).at[:, :N, :D].set(embeddings.astype(f32))
    adj_p = jnp.zeros((G, Np, Np), bf16).at[:, :N, :N].set(adjacency.astype(bf16))
    w1_p = jnp.zeros((Dp, Dp), f32).at[:D, :D].set(w1.astype(f32))
    w2_p = jnp.zeros((Dp, Dp), f32).at[:D, :D].set(w2.astype(f32))

    # Per-grid-step working set (one graph resident): bf16 adjacency +
    # f32 embeddings + f32 output + shared f32 weights.
    per_step_bytes = Np * Np * 2 + 2 * Np * Dp * 4 + 2 * Dp * Dp * 4
    # 2 layers x (A @ e + pooled @ W), counting mul+add, per graph.
    flops = G * 4 * Np * Dp * (Np + Dp)
    bytes_accessed = G * (Np * Np * 2 + 2 * Np * Dp * 4) + 2 * Dp * Dp * 4

    # Scoped-VMEM limit: sized from the actual chip with ~15% headroom for
    # compiler scratch/semaphores (v5e/v6e: ~108 MiB usable, v7x: ~54 MiB),
    # and never more than we plausibly need (double-buffered blocks + slack).
    try:
        vmem_cap = int(pltpu.get_tpu_info().vmem_capacity_bytes)
    except Exception:
        vmem_cap = 64 * 1024 * 1024  # most conservative (v7x per-core)
    vmem_limit = min(int(vmem_cap * 0.85),
                     max(32 * 1024 * 1024, 4 * per_step_bytes))

    # TODO(synk): for graphs too large for whole-adjacency-in-VMEM
    # (roughly Np > ~3.4k on v7x / ~5.2k on v5e-v6e), switch to a per-layer
    # tiled kernel: grid=(Np/TM, Np/TK), (TM,TK) adjacency blocks, (TK,Dp)
    # embedding blocks, (TM,Dp) f32 accumulator with pl.when init/finalize,
    # dimension_semantics=("parallel","arbitrary"), and skip the wrapper-side
    # padded-adjacency copy (mask the ragged tail in-kernel).

    out_p = pl.pallas_call(
        egcn_kernel,
        out_shape=jax.ShapeDtypeStruct((G, Np, Dp), f32),
        grid=(G,),
        in_specs=[
            pl.BlockSpec((None, Np, Dp), lambda g: (g, 0, 0)),   # embeddings
            pl.BlockSpec((None, Np, Np), lambda g: (g, 0, 0)),   # adjacency (bf16)
            pl.BlockSpec((Dp, Dp), lambda g: (0, 0)),            # W1 (shared)
            pl.BlockSpec((Dp, Dp), lambda g: (0, 0)),            # W2 (shared)
        ],
        out_specs=pl.BlockSpec((None, Np, Dp), lambda g: (g, 0, 0)),
        compiler_params=pltpu.CompilerParams(
            dimension_semantics=("parallel",),
            vmem_limit_bytes=vmem_limit),
        cost_estimate=pl.CostEstimate(
            flops=flops, transcendentals=G * Np, bytes_accessed=bytes_accessed),
    )(emb_p, adj_p, w1_p, w2_p)

    out = out_p[:, :N, :D]
    return out[0] if single else out


def xavier_uniform(key, shape):
    fan_in, fan_out = shape
    bound = (6.0 / (fan_in + fan_out)) ** 0.5
    return jax.random.uniform(key, shape, jnp.float32, minval=-bound, maxval=bound)


if __name__ == "__main__":
    G = 4             # batch of small graphs
    N = 16            # number of graph nodes
    D = 32            # embedding_dims

    key = jax.random.PRNGKey(0)
    k_emb, k_adj, k_w1, k_w2 = jax.random.split(key, 4)

    embeddings = jax.random.normal(k_emb, (G, N, D), jnp.float32)

    # Random 0/1 adjacency; add self-loops so every row degree > 0
    # (matches the torch.inverse(diag(deg)) requirement of the reference).
    adjacency = (jax.random.uniform(k_adj, (G, N, N)) < 0.3).astype(jnp.float32)
    adjacency = jnp.maximum(adjacency, jnp.eye(N, dtype=jnp.float32)[None])

    # Deterministic Xavier-uniform weights for the two EGCL layers.
    w1 = xavier_uniform(k_w1, (D, D))
    w2 = xavier_uniform(k_w2, (D, D))

    out = egcn_forward(embeddings, adjacency, w1, w2)
    jax.block_until_ready(out)

    # Pure-JAX reference (original formulation with materialized norm_adj).
    deg = jnp.sum(adjacency, axis=2, keepdims=True)
    norm_adj = adjacency / deg
    e_ref = embeddings
    for w in (w1, w2):
        e_ref = jnp.maximum(
            jnp.einsum("gnm,gmd->gnd", norm_adj, e_ref) @ w, 0.0)
    assert out.shape == (G, N, D)
    assert jnp.allclose(out, e_ref, atol=1e-4, rtol=1e-4), "batched mismatch vs reference"

    # Single-graph entry point (matches the PyTorch module's signature).
    out_single = egcn_forward(embeddings[0], adjacency[0], w1, w2)
    jax.block_until_ready(out_single)
    assert out_single.shape == (N, D)
    assert jnp.allclose(out_single, e_ref[0], atol=1e-4, rtol=1e-4), "single-graph mismatch"

    print("KERNEL_OK")
</pallas_src>

<mosaic_0001>
module attributes {stable_mosaic.version = 11 : i64} {
  func.func @egcn_kernel(%arg0: i32, %arg1: memref<1x128x128xf32, #tpu.memory_space<vmem>>, %arg2: memref<1x128x128xbf16, #tpu.memory_space<vmem>>, %arg3: memref<128x128xf32, #tpu.memory_space<vmem>>, %arg4: memref<128x128xf32, #tpu.memory_space<vmem>>, %arg5: memref<1x128x128xf32, #tpu.memory_space<vmem>>) attributes {dimension_semantics = [#tpu.dimension_semantics<parallel>], iteration_bounds = array<i64: 4>, scalar_prefetch = 0 : i64, scratch_operands = 0 : i64, tpu.core_type = #tpu.core_type<tc>, window_params = [{transform_indices = @transform_0, window_bounds = array<i64: 1, 128, 128>}, {transform_indices = @transform_1, window_bounds = array<i64: 1, 128, 128>}, {pipeline_mode = #tpu.pipeline_mode<synchronous>, transform_indices = @transform_2, window_bounds = array<i64: 128, 128>}, {pipeline_mode = #tpu.pipeline_mode<synchronous>, transform_indices = @transform_3, window_bounds = array<i64: 128, 128>}, {transform_indices = @transform_4, window_bounds = array<i64: 1, 128, 128>}]} {
    %c0 = arith.constant 0 : index
    %c0_0 = arith.constant 0 : index
    %c0_1 = arith.constant 0 : index
    %0 = vector.load %arg2[%c0, %c0_0, %c0_1] : memref<1x128x128xbf16, #tpu.memory_space<vmem>>, vector<1x128x128xbf16>
    %1 = vector.shape_cast %0 : vector<1x128x128xbf16> to vector<128x128xbf16>
    %2 = arith.extf %1 : vector<128x128xbf16> to vector<128x128xf32>
    %cst = arith.constant dense<0.000000e+00> : vector<128xf32>
    %3 = vector.multi_reduction <add>, %2, %cst [1] : vector<128x128xf32> to vector<128xf32>
    %4 = vector.shape_cast %3 : vector<128xf32> to vector<128x1xf32>
    %cst_2 = arith.constant 0.000000e+00 : f32
    %5 = vector.broadcast %cst_2 : f32 to vector<128x1xf32>
    %6 = arith.cmpf ogt, %4, %5 : vector<128x1xf32>
    %7 = tpu.reciprocal %4 : vector<128x1xf32> -> vector<128x1xf32>
    %cst_3 = arith.constant 0.000000e+00 : f32
    %8 = vector.broadcast %cst_3 : f32 to vector<128x1xf32>
    %9 = arith.select %6, %7, %8 : vector<128x1xi1>, vector<128x1xf32>
    %c0_4 = arith.constant 0 : index
    %c0_5 = arith.constant 0 : index
    %c0_6 = arith.constant 0 : index
    %10 = vector.load %arg1[%c0_4, %c0_5, %c0_6] : memref<1x128x128xf32, #tpu.memory_space<vmem>>, vector<1x128x128xf32>
    %11 = vector.shape_cast %10 : vector<1x128x128xf32> to vector<128x128xf32>
    %cst_7 = arith.constant dense<0.000000e+00> : vector<128x128xf32>
    %12 = tpu.matmul %2, %11, %cst_7 {dimension_numbers = #tpu.dot_dimension_numbers<[1], [0], [0], [1], [0, 0, 1, 1], [], []>} : vector<128x128xf32>, vector<128x128xf32>, vector<128x128xf32> -> vector<128x128xf32>
    %13 = vector.broadcast %9 : vector<128x1xf32> to vector<128x128xf32>
    %14 = arith.mulf %12, %13 : vector<128x128xf32>
    %c0_8 = arith.constant 0 : index
    %c0_9 = arith.constant 0 : index
    %15 = vector.load %arg3[%c0_8, %c0_9] : memref<128x128xf32, #tpu.memory_space<vmem>>, vector<128x128xf32>
    %cst_10 = arith.constant dense<0.000000e+00> : vector<128x128xf32>
    %16 = tpu.matmul %14, %15, %cst_10 {dimension_numbers = #tpu.dot_dimension_numbers<[1], [0], [0], [1], [0, 0, 1, 1], [], []>} : vector<128x128xf32>, vector<128x128xf32>, vector<128x128xf32> -> vector<128x128xf32>
    %cst_11 = arith.constant 0.000000e+00 : f32
    %17 = vector.broadcast %cst_11 : f32 to vector<128x128xf32>
    %18 = arith.maximumf %16, %17 : vector<128x128xf32>
    %cst_12 = arith.constant dense<0.000000e+00> : vector<128x128xf32>
    %19 = tpu.matmul %2, %18, %cst_12 {dimension_numbers = #tpu.dot_dimension_numbers<[1], [0], [0], [1], [0, 0, 1, 1], [], []>} : vector<128x128xf32>, vector<128x128xf32>, vector<128x128xf32> -> vector<128x128xf32>
    %20 = vector.broadcast %9 : vector<128x1xf32> to vector<128x128xf32>
    %21 = arith.mulf %19, %20 : vector<128x128xf32>
    %c0_13 = arith.constant 0 : index
    %c0_14 = arith.constant 0 : index
    %22 = vector.load %arg4[%c0_13, %c0_14] : memref<128x128xf32, #tpu.memory_space<vmem>>, vector<128x128xf32>
    %cst_15 = arith.constant dense<0.000000e+00> : vector<128x128xf32>
    %23 = tpu.matmul %21, %22, %cst_15 {dimension_numbers = #tpu.dot_dimension_numbers<[1], [0], [0], [1], [0, 0, 1, 1], [], []>} : vector<128x128xf32>, vector<128x128xf32>, vector<128x128xf32> -> vector<128x128xf32>
    %cst_16 = arith.constant 0.000000e+00 : f32
    %24 = vector.broadcast %cst_16 : f32 to vector<128x128xf32>
    %25 = arith.maximumf %23, %24 : vector<128x128xf32>
    %c0_17 = arith.constant 0 : index
    %c0_18 = arith.constant 0 : index
    %c0_19 = arith.constant 0 : index
    %26 = vector.load %arg5[%c0_17, %c0_18, %c0_19] : memref<1x128x128xf32, #tpu.memory_space<vmem>>, vector<1x128x128xf32>
    %27 = vector.shape_cast %26 : vector<1x128x128xf32> to vector<128x128xf32>
    %28 = vector.shape_cast %25 : vector<128x128xf32> to vector<1x128x128xf32>
    tpu.vector_store %arg5[%c0_17, %c0_18, %c0_19], %28 {strides = array<i32>} : memref<1x128x128xf32, #tpu.memory_space<vmem>>, vector<1x128x128xf32>,
    return
  }
  func.func @transform_0(%arg0: i32) -> (i32, i32, i32) {
    %c0_i32 = arith.constant 0 : i32
    %c0_i32_0 = arith.constant 0 : i32
    %c0_i32_1 = arith.constant 0 : i32
    return %arg0, %c0_i32, %c0_i32_0 : i32, i32, i32
  }
  func.func @transform_1(%arg0: i32) -> (i32, i32, i32) {
    %c0_i32 = arith.constant 0 : i32
    %c0_i32_0 = arith.constant 0 : i32
    %c0_i32_1 = arith.constant 0 : i32
    return %arg0, %c0_i32, %c0_i32_0 : i32, i32, i32
  }
  func.func @transform_2(%arg0: i32) -> (i32, i32) {
    %c0_i32 = arith.constant 0 : i32
    %c0_i32_0 = arith.constant 0 : i32
    %c0_i32_1 = arith.constant 0 : i32
    return %c0_i32, %c0_i32_0 : i32, i32
  }
  func.func @transform_3(%arg0: i32) -> (i32, i32) {
    %c0_i32 = arith.constant 0 : i32
    %c0_i32_0 = arith.constant 0 : i32
    %c0_i32_1 = arith.constant 0 : i32
    return %c0_i32, %c0_i32_0 : i32, i32
  }
  func.func @transform_4(%arg0: i32) -> (i32, i32, i32) {
    %c0_i32 = arith.constant 0 : i32
    %c0_i32_0 = arith.constant 0 : i32
    %c0_i32_1 = arith.constant 0 : i32
    return %arg0, %c0_i32, %c0_i32_0 : i32, i32, i32
  }
}

</mosaic_0001>

<llo_original>
// kernel: tpu_custom_call.1
$region0: #{tpu_custom_call.1}
  #allocation0 [shape = 'u32[]', space=smem, size = 0x4, offset = 0x4, fixed_abs, tag = 'smem constant byte address 0x4 - core index']
  #allocation1 [shape = 'u32[144,128]{1,0:T(1,128)}', space=vmem, size = 0x12000, scoped, tag = 'internal scratch']
  %s0 = inlined_call_operand.hbm [shape: f32[4,128,128], index: 0, kind: input, shape index: {}]
  %s1 = inlined_call_operand.hbm [shape: bf16[4,128,128], index: 1, kind: input, shape index: {}]
  %s2 = inlined_call_operand.hbm [shape: f32[128,128], index: 2, kind: input, shape index: {}]
  %s3 = inlined_call_operand.hbm [shape: f32[128,128], index: 3, kind: input, shape index: {}]
  %s4 = inlined_call_operand.hbm [shape: f32[4,128,128], index: 4, kind: output, shape index: {}]
  %s5 = sld [smem:[#allocation0]]
  $region65: #{tpu_custom_call.1} parent=0
    _
  %s7 = ssub.s32 1, %s5
  %s8 = scalar_select 0, %s7, %s5
  $region1: #{tpu_custom_call.1} parent=0
    #allocation2 [shape = 'u8[131072]{0}', space=vmem, size = 0x20000, scoped, tag = 'input window, operand 0']
    #allocation3 [shape = 's32[2]{0}', space=sflag, size = 0x8, scoped, tag = 'scoped memory for tpu_custom_call.1']
    #allocation4 [shape = 's32[2]{0}', space=sflag, size = 0x8, scoped, tag = 'scoped memory for tpu_custom_call.1']
    #allocation5 [shape = 'u8[65536]{0}', space=vmem, size = 0x10000, scoped, tag = 'input window, operand 1']
    #allocation6 [shape = 's32[2]{0}', space=sflag, size = 0x8, scoped, tag = 'scoped memory for tpu_custom_call.1']
    #allocation7 [shape = 'u8[65536]{0}', space=vmem, size = 0x10000, scoped, tag = 'input window, operand 2, single buffered']
    #allocation8 [shape = 'u8[65536]{0}', space=vmem, size = 0x10000, scoped, tag = 'input window, operand 3, single buffered']
    #allocation9 [shape = 's32[1]{0}', space=sflag, size = 0x4, scoped, tag = 'scoped memory for tpu_custom_call.1']
    #allocation10 [shape = 'u8[131072]{0}', space=vmem, size = 0x20000, scoped, tag = 'output window, operand 0']
    %9 = vsyncpa [#allocation3], 0
    %s10 = scalar_lea.sflag [#allocation3], 1
    %11 = vsyncpa %s10, 0
    %12 = vsyncpa [#allocation6], 0
    %s13 = scalar_lea.sflag [#allocation6], 1
    %14 = vsyncpa %s13, 0
    %15 = vsyncpa [#allocation9], 0
    %16 = vsyncpa [#allocation4], 0
    %s17 = scalar_lea.sflag [#allocation4], 1
    %18 = vsyncpa %s17, 0
    loop: start=0, step=1, limit=6
    $region2: #{tpu_custom_call.1} parent=1 // loop_pre_header
      _
    $region3: #{tpu_custom_call.1} parent=1 // loop_header
      %s20 = sphi 0, %s24
      %p21 = scmp.ge.s32.totalorder %s20, 6
      %s30 = sphi 0, %s32
      %s33 = sphi 0, %s30
      %s34 = sphi 0, %s33
      %s50 = sphi 0, %s34
      %s56 = sphi 0, %s58
      %s59 = sphi 0, %s56
      %s60 = sphi 0, %s59
      %s76 = sphi 0, %s60
      %s80 = sphi 0, %s80
      %s82 = sphi 0, %s80
      %s83 = sphi 0, %s82
      %s97 = sphi 0, %s83
      %s101 = sphi 0, %s101
      %s103 = sphi 0, %s101
      %s104 = sphi 0, %s103
      %s118 = sphi 0, %s104
      %s124 = sphi 0, %s126
      %s127 = sphi 0, %s124
      %s128 = sphi 0, %s127
      %s144 = sphi 0, %s128
    $region4: #{tpu_custom_call.1} parent=1 // loop_header_branch
      %23 = sbr.rel (%p21) target = $region8
    $region5: #{tpu_custom_call.1} parent=1 // loop_body
      %s25 = ssub.s32 %s20, 1
      %s26 = ssub.s32 %s20, 2
      %s27 = sadd.s32 %s20, 1
      %s28 = ssub.s32 %s20, %s27
      %p29 = scmp.eq.s32.totalorder %s28, 0
      %s31 = sadd.s32 %s30, 1
      %s32 = scalar_select %p29, %s30, %s31
      %p35 = pneg %p29
      %p36 = scmp.eq.s32.totalorder %s20, 3
      %p37 = por %p35, %p36
      %p38 = scmp.ne.s32.totalorder %s30, %s33
      %p39 = scmp.eq.s32.totalorder %s20, 0
      %p40 = por %p38, %p39
      %p41 = scmp.ne.s32.totalorder %s30, %s33
      %p42 = scmp.eq.s32.totalorder %s25, 3
      %p43 = por %p41, %p42
      %p44 = scmp.ne.s32.totalorder %s33, %s34
      %p45 = scmp.eq.s32.totalorder %s25, 0
      %p46 = por %p44, %p45
      %p47 = scmp.ne.s32.totalorder %s33, %s34
      %p48 = scmp.eq.s32.totalorder %s26, 3
      %p49 = por %p47, %p48
      %p51 = scmp.ne.s32.totalorder %s34, %s50
      %p52 = scmp.eq.s32.totalorder %s26, 0
      %p53 = por %p51, %p52
      %s54 = ssub.s32 %s20, %s27
      %p55 = scmp.eq.s32.totalorder %s54, 0
      %s57 = sadd.s32 %s56, 1
      %s58 = scalar_select %p55, %s56, %s57
      %p61 = pneg %p55
      %p62 = scmp.eq.s32.totalorder %s20, 3
      %p63 = por %p61, %p62
      %p64 = scmp.ne.s32.totalorder %s56, %s59
      %p65 = scmp.eq.s32.totalorder %s20, 0
      %p66 = por %p64, %p65
      %p67 = scmp.ne.s32.totalorder %s56, %s59
      %p68 = scmp.eq.s32.totalorder %s25, 3
      %p69 = por %p67, %p68
      %p70 = scmp.ne.s32.totalorder %s59, %s60
      %p71 = scmp.eq.s32.totalorder %s25, 0
      %p72 = por %p70, %p71
      %p73 = scmp.ne.s32.totalorder %s59, %s60
      %p74 = scmp.eq.s32.totalorder %s26, 3
      %p75 = por %p73, %p74
      %p77 = scmp.ne.s32.totalorder %s60, %s76
      %p78 = scmp.eq.s32.totalorder %s26, 0
      %p79 = por %p77, %p78
      %s81 = sadd.s32 %s80, 1
      %p84 = scmp.eq.s32.totalorder %s20, 3
      %p85 = scmp.ne.s32.totalorder %s80, %s82
      %p86 = scmp.eq.s32.totalorder %s20, 0
      %p87 = por %p85, %p86
      %p88 = scmp.ne.s32.totalorder %s80, %s82
      %p89 = scmp.eq.s32.totalorder %s25, 3
      %p90 = por %p88, %p89
      %p91 = scmp.ne.s32.totalorder %s82, %s83
      %p92 = scmp.eq.s32.totalorder %s25, 0
      %p93 = por %p91, %p92
      %p94 = scmp.ne.s32.totalorder %s82, %s83
      %p95 = scmp.eq.s32.totalorder %s26, 3
      %p96 = por %p94, %p95
      %p98 = scmp.ne.s32.totalorder %s83, %s97
      %p99 = scmp.eq.s32.totalorder %s26, 0
      %p100 = por %p98, %p99
      %s102 = sadd.s32 %s101, 1
      %p105 = scmp.eq.s32.totalorder %s20, 3
      %p106 = scmp.ne.s32.totalorder %s101, %s103
      %p107 = scmp.eq.s32.totalorder %s20, 0
      %p108 = por %p106, %p107
      %p109 = scmp.ne.s32.totalorder %s101, %s103
      %p110 = scmp.eq.s32.totalorder %s25, 3
      %p111 = por %p109, %p110
      %p112 = scmp.ne.s32.totalorder %s103, %s104
      %p113 = scmp.eq.s32.totalorder %s25, 0
      %p114 = por %p112, %p113
      %p115 = scmp.ne.s32.totalorder %s103, %s104
      %p116 = scmp.eq.s32.totalorder %s26, 3
      %p117 = por %p115, %p116
      %p119 = scmp.ne.s32.totalorder %s104, %s118
      %p120 = scmp.eq.s32.totalorder %s26, 0
      %p121 = por %p119, %p120
      %s122 = ssub.s32 %s20, %s27
      %p123 = scmp.eq.s32.totalorder %s122, 0
      %s125 = sadd.s32 %s124, 1
      %s126 = scalar_select %p123, %s124, %s125
      %p129 = pneg %p123
      %p130 = scmp.eq.s32.totalorder %s20, 3
      %p131 = por %p129, %p130
      %p132 = scmp.ne.s32.totalorder %s124, %s127
      %p133 = scmp.eq.s32.totalorder %s20, 0
      %p134 = por %p132, %p133
      %p135 = scmp.ne.s32.totalorder %s124, %s127
      %p136 = scmp.eq.s32.totalorder %s25, 3
      %p137 = por %p135, %p136
      %p138 = scmp.ne.s32.totalorder %s127, %s128
      %p139 = scmp.eq.s32.totalorder %s25, 0
      %p140 = por %p138, %p139
      %p141 = scmp.ne.s32.totalorder %s127, %s128
      %p142 = scmp.eq.s32.totalorder %s26, 3
      %p143 = por %p141, %p142
      %p145 = scmp.ne.s32.totalorder %s128, %s144
      %p146 = scmp.eq.s32.totalorder %s26, 0
      %p147 = por %p145, %p146
      %p148 = scmp.le.s32.totalorder 1, %s20
      %p149 = scmp.lt.s32.totalorder %s20, 5
      %p150 = pnand %p148, %p149
      %p151 = pneg %p150
      // Predicated region
      $region9: #{tpu_custom_call.1} parent=5 // pred_check
        _
      $region10: #{tpu_custom_call.1} parent=5 // pred_check_branch
        %153 = sbr.rel (%p150) target = $region12
      $region11: #{tpu_custom_call.1} parent=5 // pred_region
        %s154 = ssub.s32 %s20, 1
        // Predicated region
        $region13: #{tpu_custom_call.1} parent=11 // pred_check
          %p155 = pneg %p93
        $region14: #{tpu_custom_call.1} parent=11 // pred_check_branch
          %157 = sbr.rel (%p155) target = $region16
        $region15: #{tpu_custom_call.1} parent=11 // pred_region
          %s159 = ssub.s32 2048, 2048
          %160 = vsyncadd [#allocation6], %s159
          %s161 = sshll.u32 [#allocation7], 4
          %s162 = int_to_ptr.vmem [resolvable:$true] %s161
          %167 = dma.hbm_to_vmem [thread:$0]  %s2, 2048, %s162, [#allocation6], 128, 128, 8
        $region16: #{tpu_custom_call.1} parent=11 // pred_fallthru
          _
        // Predicated region
        $region17: #{tpu_custom_call.1} parent=11 // pred_check
          %p168 = pneg %p114
        $region18: #{tpu_custom_call.1} parent=11 // pred_check_branch
          %170 = sbr.rel (%p168) target = $region20
        $region19: #{tpu_custom_call.1} parent=11 // pred_region
          %s172 = ssub.s32 2048, 2048
          %173 = vsyncadd [#allocation9], %s172
          %s174 = sshll.u32 [#allocation8], 4
          %s175 = int_to_ptr.vmem [resolvable:$true] %s174
          %180 = dma.hbm_to_vmem [thread:$0]  %s3, 2048, %s175, [#allocation9], 128, 128, 8
        $region20: #{tpu_custom_call.1} parent=11 // pred_fallthru
          _
      $region12: #{tpu_custom_call.1} parent=5 // pred_fallthru
        _
      %p181 = scmp.lt.s32.totalorder %s20, 4
      // Predicated region
      $region21: #{tpu_custom_call.1} parent=5 // pred_check
        %p182 = pneg %p181
      $region22: #{tpu_custom_call.1} parent=5 // pred_check_branch
        %184 = sbr.rel (%p182) target = $region24
      $region23: #{tpu_custom_call.1} parent=5 // pred_region
        // Predicated region
        $region25: #{tpu_custom_call.1} parent=23 // pred_check
          %p185 = pneg %p40
        $region26: #{tpu_custom_call.1} parent=23 // pred_check_branch
          %187 = sbr.rel (%p185) target = $region28
        $region27: #{tpu_custom_call.1} parent=23 // pred_region
          %s188 = sand.u32 %s30, 1
          %s189 = scalar_lea.sflag [#allocation3], %s188
          %s190 = sand.u32 %s30, 1
          %s191 = smul.addr %s190, 128
          %s192 = scalar_lea.vmem [#allocation2], %s191
          %s194 = ssub.s32 2048, 2048
          %195 = vsyncadd %s189, %s194
          %s196 = smul.addr %s20, 16
          %s197 = smul.addr %s196, 128
          %s198 = scalar_lea.hbm %s0, %s197
          %s199 = sshll.u32 %s192, 4
          %s200 = int_to_ptr.vmem [resolvable:$true] %s199
          %205 = dma.hbm_to_vmem [thread:$0]  %s198, 2048, %s200, %s189, 128, 128, 8
        $region28: #{tpu_custom_call.1} parent=23 // pred_fallthru
          _
        // Predicated region
        $region29: #{tpu_custom_call.1} parent=23 // pred_check
          %p206 = pneg %p66
        $region30: #{tpu_custom_call.1} parent=23 // pred_check_branch
          %208 = sbr.rel (%p206) target = $region32
        $region31: #{tpu_custom_call.1} parent=23 // pred_region
          %s209 = sand.u32 %s20, 1
          %s210 = scalar_lea.sflag [#allocation6], %s209
          %s211 = sand.u32 %s56, 1
          %s212 = smul.addr %s211, 64
          %s213 = scalar_lea.vmem [#allocation5], %s212
          %s215 = ssub.s32 1024, 1024
          %216 = vsyncadd %s210, %s215
          %s217 = smul.addr %s20, 16
          %s218 = smul.addr %s217, 64
          %s219 = scalar_lea.hbm %s1, %s218
          %s220 = sshll.u32 %s213, 4
          %s221 = int_to_ptr.vmem [resolvable:$true] %s220
          %226 = dma.hbm_to_vmem [thread:$0]  %s219, 1024, %s221, %s210, 64, 64, 4
        $region32: #{tpu_custom_call.1} parent=23 // pred_fallthru
          _
      $region24: #{tpu_custom_call.1} parent=5 // pred_fallthru
        _
      %p227 = scmp.le.s32.totalorder 1, %s20
      %p228 = scmp.lt.s32.totalorder %s20, 5
      %p229 = pnand %p227, %p228
      %p230 = pneg %p229
      // Predicated region
      $region33: #{tpu_custom_call.1} parent=5 // pred_check
        _
      $region34: #{tpu_custom_call.1} parent=5 // pred_check_branch
        %232 = sbr.rel (%p229) target = $region36
      $region35: #{tpu_custom_call.1} parent=5 // pred_region
        %s233 = ssub.s32 %s20, 1
        %s234 = sand.u32 %s33, 1
        %s235 = scalar_lea.sflag [#allocation3], %s234
        %s236 = sand.u32 %s33, 1
        %s237 = smul.addr %s236, 128
        %s238 = scalar_lea.vmem [#allocation2], %s237
        // Predicated region
        $region37: #{tpu_custom_call.1} parent=35 // pred_check
          %p239 = pneg %p46
        $region38: #{tpu_custom_call.1} parent=35 // pred_check_branch
          %241 = sbr.rel (%p239) target = $region40
        $region39: #{tpu_custom_call.1} parent=35 // pred_region
          %242 = dma.done %s235, 2048
        $region40: #{tpu_custom_call.1} parent=35 // pred_fallthru
          _
        %s243 = sand.u32 %s25, 1
        %s244 = scalar_lea.sflag [#allocation6], %s243
        %s245 = sand.u32 %s59, 1
        %s246 = smul.addr %s245, 64
        %s247 = scalar_lea.vmem [#allocation5], %s246
        // Predicated region
        $region41: #{tpu_custom_call.1} parent=35 // pred_check
          %p248 = pneg %p72
        $region42: #{tpu_custom_call.1} parent=35 // pred_check_branch
          %250 = sbr.rel (%p248) target = $region44
        $region43: #{tpu_custom_call.1} parent=35 // pred_region
          %251 = dma.done %s244, 1024
        $region44: #{tpu_custom_call.1} parent=35 // pred_fallthru
          _
        // Predicated region
        $region45: #{tpu_custom_call.1} parent=35 // pred_check
          %p252 = pneg %p93
        $region46: #{tpu_custom_call.1} parent=35 // pred_check_branch
          %254 = sbr.rel (%p252) target = $region48
        $region47: #{tpu_custom_call.1} parent=35 // pred_region
          %255 = dma.done [#allocation6], 2048
        $region48: #{tpu_custom_call.1} parent=35 // pred_fallthru
          _
        // Predicated region
        $region49: #{tpu_custom_call.1} parent=35 // pred_check
          %p256 = pneg %p114
        $region50: #{tpu_custom_call.1} parent=35 // pred_check_branch
          %258 = sbr.rel (%p256) target = $region52
        $region51: #{tpu_custom_call.1} parent=35 // pred_region
          %259 = dma.done [#allocation9], 2048
        $region52: #{tpu_custom_call.1} parent=35 // pred_fallthru
          _
        %s260 = sand.u32 %s33, 1
        %s261 = scalar_lea.sflag [#allocation3], %s260
        %s262 = sand.u32 %s33, 1
        %s263 = smul.addr %s262, 128
        %s264 = scalar_lea.vmem [#allocation2], %s263
        %p265 = pneg %p46
        %p266 = pneg %p43
        %s267 = sand.u32 %s25, 1
        %s268 = scalar_lea.sflag [#allocation6], %s267
        %s269 = sand.u32 %s59, 1
        %s270 = smul.addr %s269, 64
        %s271 = scalar_lea.vmem [#allocation5], %s270
        %p272 = pneg %p72
        %p273 = pneg %p69
        %p274 = pneg %p93
        %p275 = pneg %p90
        %p276 = pneg %p114
        %p277 = pneg %p111
        %p278 = pneg %p140
        %p279 = pneg %p137
        %s280 = sand.u32 %s127, 1
        %s281 = scalar_lea.sflag [#allocation4], %s280
        %s282 = sand.u32 %s127, 1
        %s283 = smul.addr %s282, 128
        %s284 = scalar_lea.vmem [#allocation10], %s283
        %v285 = vld [vmem:[%s247] sm:$0xf]
        %v286 = vld [vmem:[%s247 + $0x4] sm:$0xf]
        %v287 = vld [vmem:[%s247 + $0x8] sm:$0xf]
        %v288 = vld [vmem:[%s247 + $0xc] sm:$0xf]
        %v289 = vld [vmem:[%s247 + $0x10] sm:$0xf]
        %v290 = vld [vmem:[%s247 + $0x14] sm:$0xf]
        %v291 = vld [vmem:[%s247 + $0x18] sm:$0xf]
        %v292 = vld [vmem:[%s247 + $0x1c] sm:$0xf]
        %v293 = vld [vmem:[%s247 + $0x20] sm:$0xf]
        %v294 = vld [vmem:[%s247 + $0x24] sm:$0xf]
        %v295 = vld [vmem:[%s247 + $0x28] sm:$0xf]
        %v296 = vld [vmem:[%s247 + $0x2c] sm:$0xf]
        %v297 = vld [vmem:[%s247 + $0x30] sm:$0xf]
        %v298 = vld [vmem:[%s247 + $0x34] sm:$0xf]
        %v299 = vld [vmem:[%s247 + $0x38] sm:$0xf]
        %v300 = vld [vmem:[%s247 + $0x3c] sm:$0xf]
        %v301 = vunpack.c.l.bf16 %v285
        %v302 = vunpack.c.l.bf16 %v286
        %v303 = vunpack.c.l.bf16 %v287
        %v304 = vunpack.c.l.bf16 %v288
        %v305 = vunpack.c.l.bf16 %v289
        %v306 = vunpack.c.l.bf16 %v290
        %v307 = vunpack.c.l.bf16 %v291
        %v308 = vunpack.c.l.bf16 %v292
        %v309 = vunpack.c.l.bf16 %v293
        %v310 = vunpack.c.l.bf16 %v294
        %v311 = vunpack.c.l.bf16 %v295
        %v312 = vunpack.c.l.bf16 %v296
        %v313 = vunpack.c.l.bf16 %v297
        %v314 = vunpack.c.l.bf16 %v298
        %v315 = vunpack.c.l.bf16 %v299
        %v316 = vunpack.c.l.bf16 %v300
        %317 = vadd.xlane.f32.xlu0 %v301
        %v318 = vpop.xlane.xlu0 %317
        %319 = vadd.xlane.f32.xlu0 %v302
        %v320 = vpop.xlane.xlu0 %319
        %321 = vadd.xlane.f32.xlu0 %v303
        %v322 = vpop.xlane.xlu0 %321
        %323 = vadd.xlane.f32.xlu0 %v304
        %v324 = vpop.xlane.xlu0 %323
        %325 = vadd.xlane.f32.xlu0 %v305
        %v326 = vpop.xlane.xlu0 %325
        %327 = vadd.xlane.f32.xlu0 %v306
        %v328 = vpop.xlane.xlu0 %327
        %329 = vadd.xlane.f32.xlu0 %v307
        %v330 = vpop.xlane.xlu0 %329
        %331 = vadd.xlane.f32.xlu0 %v308
        %v332 = vpop.xlane.xlu0 %331
        %333 = vadd.xlane.f32.xlu0 %v309
        %v334 = vpop.xlane.xlu0 %333
        %335 = vadd.xlane.f32.xlu0 %v310
        %v336 = vpop.xlane.xlu0 %335
        %337 = vadd.xlane.f32.xlu0 %v311
        %v338 = vpop.xlane.xlu0 %337
        %339 = vadd.xlane.f32.xlu0 %v312
        %v340 = vpop.xlane.xlu0 %339
        %341 = vadd.xlane.f32.xlu0 %v313
        %v342 = vpop.xlane.xlu0 %341
        %343 = vadd.xlane.f32.xlu0 %v314
        %v344 = vpop.xlane.xlu0 %343
        %345 = vadd.xlane.f32.xlu0 %v315
        %v346 = vpop.xlane.xlu0 %345
        %347 = vadd.xlane.f32.xlu0 %v316
        %v348 = vpop.xlane.xlu0 %347
        %vm349 = vcmp.gt.f32.partialorder %v318, 0.0
        %vm350 = vcmp.gt.f32.partialorder %v320, 0.0
        %vm351 = vcmp.gt.f32.partialorder %v322, 0.0
        %vm352 = vcmp.gt.f32.partialorder %v324, 0.0
        %vm353 = vcmp.gt.f32.partialorder %v326, 0.0
        %vm354 = vcmp.gt.f32.partialorder %v328, 0.0
        %vm355 = vcmp.gt.f32.partialorder %v330, 0.0
        %vm356 = vcmp.gt.f32.partialorder %v332, 0.0
        %vm357 = vcmp.gt.f32.partialorder %v334, 0.0
        %vm358 = vcmp.gt.f32.partialorder %v336, 0.0
        %vm359 = vcmp.gt.f32.partialorder %v338, 0.0
        %vm360 = vcmp.gt.f32.partialorder %v340, 0.0
        %vm361 = vcmp.gt.f32.partialorder %v342, 0.0
        %vm362 = vcmp.gt.f32.partialorder %v344, 0.0
        %vm363 = vcmp.gt.f32.partialorder %v346, 0.0
        %vm364 = vcmp.gt.f32.partialorder %v348, 0.0
        %v365 = vrcp.pop %v318
        %v366 = vrcp.pop %v320
        %v367 = vrcp.pop %v322
        %v368 = vrcp.pop %v324
        %v369 = vrcp.pop %v326
        %v370 = vrcp.pop %v328
        %v371 = vrcp.pop %v330
        %v372 = vrcp.pop %v332
        %v373 = vrcp.pop %v334
        %v374 = vrcp.pop %v336
        %v375 = vrcp.pop %v338
        %v376 = vrcp.pop %v340
        %v377 = vrcp.pop %v342
        %v378 = vrcp.pop %v344
        %v379 = vrcp.pop %v346
        %v380 = vrcp.pop %v348
        %v381 = vsel %vm349, %v365, 0.0
        %v382 = vsel %vm350, %v366, 0.0
        %v383 = vsel %vm351, %v367, 0.0
        %v384 = vsel %vm352, %v368, 0.0
        %v385 = vsel %vm353, %v369, 0.0
        %v386 = vsel %vm354, %v370, 0.0
        %v387 = vsel %vm355, %v371, 0.0
        %v388 = vsel %vm356, %v372, 0.0
        %v389 = vsel %vm357, %v373, 0.0
        %v390 = vsel %vm358, %v374, 0.0
        %v391 = vsel %vm359, %v375, 0.0
        %v392 = vsel %vm360, %v376, 0.0
        %v393 = vsel %vm361, %v377, 0.0
        %v394 = vsel %vm362, %v378, 0.0
        %v395 = vsel %vm363, %v379, 0.0
        %v396 = vsel %vm364, %v380, 0.0
        %v397 = vld [vmem:[%s238] sm:$0xff]
        %v398 = vld [vmem:[%s238 + $0x8] sm:$0xff]
        %v399 = vld [vmem:[%s238 + $0x10] sm:$0xff]
        %v400 = vld [vmem:[%s238 + $0x18] sm:$0xff]
        %v401 = vld [vmem:[%s238 + $0x20] sm:$0xff]
        %v402 = vld [vmem:[%s238 + $0x28] sm:$0xff]
        %v403 = vld [vmem:[%s238 + $0x30] sm:$0xff]
        %v404 = vld [vmem:[%s238 + $0x38] sm:$0xff]
        %v405 = vld [vmem:[%s238 + $0x40] sm:$0xff]
        %v406 = vld [vmem:[%s238 + $0x48] sm:$0xff]
        %v407 = vld [vmem:[%s238 + $0x50] sm:$0xff]
        %v408 = vld [vmem:[%s238 + $0x58] sm:$0xff]
        %v409 = vld [vmem:[%s238 + $0x60] sm:$0xff]
        %v410 = vld [vmem:[%s238 + $0x68] sm:$0xff]
        %v411 = vld [vmem:[%s238 + $0x70] sm:$0xff]
        %v412 = vld [vmem:[%s238 + $0x78] sm:$0xff]
        %413 = vmatprep.subr.mxu0 0.0
        %414 = vmatpush1.msra.mxu0 %v397
        %415 = vmatprep.subr.mxu0 0.0
        %416 = vmatpush1.msra.mxu0 %v398
        %417 = vmatprep.subr.mxu0 0.0
        %418 = vmatpush1.msra.mxu0 %v399
        %419 = vmatprep.subr.mxu0 0.0
        %420 = vmatpush1.msra.mxu0 %v400
        %421 = vmatprep.subr.mxu0 0.0
        %422 = vmatpush1.msra.mxu0 %v401
        %423 = vmatprep.subr.mxu0 0.0
        %424 = vmatpush1.msra.mxu0 %v402
        %425 = vmatprep.subr.mxu0 0.0
        %426 = vmatpush1.msra.mxu0 %v403
        %427 = vmatprep.subr.mxu0 0.0
        %428 = vmatpush1.msra.mxu0 %v404
        %429 = vmatprep.subr.mxu0 0.0
        %430 = vmatpush1.msra.mxu0 %v405
        %431 = vmatprep.subr.mxu0 0.0
        %432 = vmatpush1.msra.mxu0 %v406
        %433 = vmatprep.subr.mxu0 0.0
        %434 = vmatpush1.msra.mxu0 %v407
        %435 = vmatprep.subr.mxu0 0.0
        %436 = vmatpush1.msra.mxu0 %v408
        %437 = vmatprep.subr.mxu0 0.0
        %438 = vmatpush1.msra.mxu0 %v409
        %439 = vmatprep.subr.mxu0 0.0
        %440 = vmatpush1.msra.mxu0 %v410
        %441 = vmatprep.subr.mxu0 0.0
        %442 = vmatpush1.msra.mxu0 %v411
        %443 = vmatprep.subr.mxu0 0.0
        %444 = vmatpush1.msra.mxu0 %v412
        %445 = vmatprep.subr.mxu0 0.0
        %446 = vmatpush1.msra.mxu0 0.0
        %447 = vmatprep.subr.mxu0 0.0
        %448 = vmatpush1.msra.mxu0 0.0
        %449 = vmatprep.subr.mxu0 0.0
        %450 = vmatpush1.msra.mxu0 0.0
        %451 = vmatprep.subr.mxu0 0.0
        %452 = vmatpush1.msra.mxu0 0.0
        %453 = vmatprep.subr.mxu0 0.0
        %454 = vmatpush1.msra.mxu0 0.0
        %455 = vmatprep.subr.mxu0 0.0
        %456 = vmatpush1.msra.mxu0 0.0
        %457 = vmatprep.subr.mxu0 0.0
        %458 = vmatpush1.msra.mxu0 0.0
        %459 = vmatprep.subr.mxu0 0.0
        %460 = vmatpush1.msra.mxu0 0.0
        %461 = vmatprep.subr.mxu0 0.0
        %462 = vmatpush1.msra.mxu0 0.0
        %463 = vmatprep.subr.mxu0 0.0
        %464 = vmatpush1.msra.mxu0 0.0
        %465 = vmatprep.subr.mxu0 0.0
        %466 = vmatpush1.msra.mxu0 0.0
        %467 = vmatprep.subr.mxu0 0.0
        %468 = vmatpush1.msra.mxu0 0.0
        %469 = vmatprep.subr.mxu0 0.0
        %470 = vmatpush1.msra.mxu0 0.0
        %471 = vmatprep.subr.mxu0 0.0
        %472 = vmatpush1.msra.mxu0 0.0
        %473 = vmatprep.subr.mxu0 0.0
        %474 = vmatpush1.msra.mxu0 0.0
        %475 = vmatprep.subr.mxu0 0.0
        %476 = vmatpush1.msra.mxu0 0.0
        %477 = vmatprep.mubr.f32.mxu0 0.0
        %478 = vmatmul.mubr.f32.gmra.mrb[0].mxu0 %v301
        %v479 = vpop.f32.mrb[0].mxu0
        %v480 = vadd.f32 0.0, %v479
        %v481 = vpop.f32.mrb[0].mxu0
        %482 = vmatprep.mubr.f32.mxu0 0.0
        %483 = vmatmul.mubr.f32.gmra.mrb[0].mxu0 %v302
        %v484 = vpop.f32.mrb[0].mxu0
        %v485 = vadd.f32 0.0, %v484
        %v486 = vpop.f32.mrb[0].mxu0
        %487 = vmatprep.mubr.f32.mxu0 0.0
        %488 = vmatmul.mubr.f32.gmra.mrb[0].mxu0 %v303
        %v489 = vpop.f32.mrb[0].mxu0
        %v490 = vadd.f32 0.0, %v489
        %v491 = vpop.f32.mrb[0].mxu0
        %492 = vmatprep.mubr.f32.mxu0 0.0
        %493 = vmatmul.mubr.f32.gmra.mrb[0].mxu0 %v304
        %v494 = vpop.f32.mrb[0].mxu0
        %v495 = vadd.f32 0.0, %v494
        %v496 = vpop.f32.mrb[0].mxu0
        %497 = vmatprep.mubr.f32.mxu0 0.0
        %498 = vmatmul.mubr.f32.gmra.mrb[0].mxu0 %v305
        %v499 = vpop.f32.mrb[0].mxu0
        %v500 = vadd.f32 0.0, %v499
        %v501 = vpop.f32.mrb[0].mxu0
        %502 = vmatprep.mubr.f32.mxu0 0.0
        %503 = vmatmul.mubr.f32.gmra.mrb[0].mxu0 %v306
        %v504 = vpop.f32.mrb[0].mxu0
        %v505 = vadd.f32 0.0, %v504
        %v506 = vpop.f32.mrb[0].mxu0
        %507 = vmatprep.mubr.f32.mxu0 0.0
        %508 = vmatmul.mubr.f32.gmra.mrb[0].mxu0 %v307
        %v509 = vpop.f32.mrb[0].mxu0
        %v510 = vadd.f32 0.0, %v509
        %v511 = vpop.f32.mrb[0].mxu0
        %512 = vmatprep.mubr.f32.mxu0 0.0
        %513 = vmatmul.mubr.f32.gmra.mrb[0].mxu0 %v308
        %v514 = vpop.f32.mrb[0].mxu0
        %v515 = vadd.f32 0.0, %v514
        %v516 = vpop.f32.mrb[0].mxu0
        %517 = vmatprep.mubr.f32.mxu0 0.0
        %518 = vmatmul.mubr.f32.gmra.mrb[0].mxu0 %v309
        %v519 = vpop.f32.mrb[0].mxu0
        %v520 = vadd.f32 0.0, %v519
        %v521 = vpop.f32.mrb[0].mxu0
        %522 = vmatprep.mubr.f32.mxu0 0.0
        %523 = vmatmul.mubr.f32.gmra.mrb[0].mxu0 %v310
        %v524 = vpop.f32.mrb[0].mxu0
        %v525 = vadd.f32 0.0, %v524
        %v526 = vpop.f32.mrb[0].mxu0
        %527 = vmatprep.mubr.f32.mxu0 0.0
        %528 = vmatmul.mubr.f32.gmra.mrb[0].mxu0 %v311
        %v529 = vpop.f32.mrb[0].mxu0
        %v530 = vadd.f32 0.0, %v529
        %v531 = vpop.f32.mrb[0].mxu0
        %532 = vmatprep.mubr.f32.mxu0 0.0
        %533 = vmatmul.mubr.f32.gmra.mrb[0].mxu0 %v312
        %v534 = vpop.f32.mrb[0].mxu0
        %v535 = vadd.f32 0.0, %v534
        %v536 = vpop.f32.mrb[0].mxu0
        %537 = vmatprep.mubr.f32.mxu0 0.0
        %538 = vmatmul.mubr.f32.gmra.mrb[0].mxu0 %v313
        %v539 = vpop.f32.mrb[0].mxu0
        %v540 = vadd.f32 0.0, %v539
        %v541 = vpop.f32.mrb[0].mxu0
        %542 = vmatprep.mubr.f32.mxu0 0.0
        %543 = vmatmul.mubr.f32.gmra.mrb[0].mxu0 %v314
        %v544 = vpop.f32.mrb[0].mxu0
        %v545 = vadd.f32 0.0, %v544
        %v546 = vpop.f32.mrb[0].mxu0
        %547 = vmatprep.mubr.f32.mxu0 0.0
        %548 = vmatmul.mubr.f32.gmra.mrb[0].mxu0 %v315
        %v549 = vpop.f32.mrb[0].mxu0
        %v550 = vadd.f32 0.0, %v549
        %v551 = vpop.f32.mrb[0].mxu0
        %552 = vmatprep.mubr.f32.mxu0 0.0
        %553 = vmatmul.mubr.f32.gmra.mrb[0].mxu0 %v316
        %v554 = vpop.f32.mrb[0].mxu0
        %v555 = vadd.f32 0.0, %v554
        %v556 = vpop.f32.mrb[0].mxu0
        %557 = vdwg.mxu0
        %v558 = vmul.f32 %v480, %v381
        %v559 = vmul.f32 %v485, %v382
        %v560 = vmul.f32 %v490, %v383
        %v561 = vmul.f32 %v495, %v384
        %v562 = vmul.f32 %v500, %v385
        %v563 = vmul.f32 %v505, %v386
        %v564 = vmul.f32 %v510, %v387
        %v565 = vmul.f32 %v515, %v388
        %v566 = vmul.f32 %v520, %v389
        %v567 = vmul.f32 %v525, %v390
        %v568 = vmul.f32 %v530, %v391
        %v569 = vmul.f32 %v535, %v392
        %v570 = vmul.f32 %v540, %v393
        %v571 = vmul.f32 %v545, %v394
        %v572 = vmul.f32 %v550, %v395
        %v573 = vmul.f32 %v555, %v396
        %v574 = vld [vmem:[#allocation7] sm:$0xff]
        %v575 = vld [vmem:[#allocation7 + $0x8] sm:$0xff]
        %v576 = vld [vmem:[#allocation7 + $0x10] sm:$0xff]
        %v577 = vld [vmem:[#allocation7 + $0x18] sm:$0xff]
        %v578 = vld [vmem:[#allocation7 + $0x20] sm:$0xff]
        %v579 = vld [vmem:[#allocation7 + $0x28] sm:$0xff]
        %v580 = vld [vmem:[#allocation7 + $0x30] sm:$0xff]
        %v581 = vld [vmem:[#allocation7 + $0x38] sm:$0xff]
        %v582 = vld [vmem:[#allocation7 + $0x40] sm:$0xff]
        %v583 = vld [vmem:[#allocation7 + $0x48] sm:$0xff]
        %v584 = vld [vmem:[#allocation7 + $0x50] sm:$0xff]
        %v585 = vld [vmem:[#allocation7 + $0x58] sm:$0xff]
        %v586 = vld [vmem:[#allocation7 + $0x60] sm:$0xff]
        %v587 = vld [vmem:[#allocation7 + $0x68] sm:$0xff]
        %v588 = vld [vmem:[#allocation7 + $0x70] sm:$0xff]
        %v589 = vld [vmem:[#allocation7 + $0x78] sm:$0xff]
        %590 = vmatprep.subr.mxu0 0.0
        %591 = vmatpush1.msra.mxu0 %v574
        %592 = vmatprep.subr.mxu0 0.0
        %593 = vmatpush1.msra.mxu0 %v575
        %594 = vmatprep.subr.mxu0 0.0
        %595 = vmatpush1.msra.mxu0 %v576
        %596 = vmatprep.subr.mxu0 0.0
        %597 = vmatpush1.msra.mxu0 %v577
        %598 = vmatprep.subr.mxu0 0.0
        %599 = vmatpush1.msra.mxu0 %v578
        %600 = vmatprep.subr.mxu0 0.0
        %601 = vmatpush1.msra.mxu0 %v579
        %602 = vmatprep.subr.mxu0 0.0
        %603 = vmatpush1.msra.mxu0 %v580
        %604 = vmatprep.subr.mxu0 0.0
        %605 = vmatpush1.msra.mxu0 %v581
        %606 = vmatprep.subr.mxu0 0.0
        %607 = vmatpush1.msra.mxu0 %v582
        %608 = vmatprep.subr.mxu0 0.0
        %609 = vmatpush1.msra.mxu0 %v583
        %610 = vmatprep.subr.mxu0 0.0
        %611 = vmatpush1.msra.mxu0 %v584
        %612 = vmatprep.subr.mxu0 0.0
        %613 = vmatpush1.msra.mxu0 %v585
        %614 = vmatprep.subr.mxu0 0.0
        %615 = vmatpush1.msra.mxu0 %v586
        %616 = vmatprep.subr.mxu0 0.0
        %617 = vmatpush1.msra.mxu0 %v587
        %618 = vmatprep.subr.mxu0 0.0
        %619 = vmatpush1.msra.mxu0 %v588
        %620 = vmatprep.subr.mxu0 0.0
        %621 = vmatpush1.msra.mxu0 %v589
        %622 = vmatprep.subr.mxu0 0.0
        %623 = vmatpush1.msra.mxu0 0.0
        %624 = vmatprep.subr.mxu0 0.0
        %625 = vmatpush1.msra.mxu0 0.0
        %626 = vmatprep.subr.mxu0 0.0
        %627 = vmatpush1.msra.mxu0 0.0
        %628 = vmatprep.subr.mxu0 0.0
        %629 = vmatpush1.msra.mxu0 0.0
        %630 = vmatprep.subr.mxu0 0.0
        %631 = vmatpush1.msra.mxu0 0.0
        %632 = vmatprep.subr.mxu0 0.0
        %633 = vmatpush1.msra.mxu0 0.0
        %634 = vmatprep.subr.mxu0 0.0
        %635 = vmatpush1.msra.mxu0 0.0
        %636 = vmatprep.subr.mxu0 0.0
        %637 = vmatpush1.msra.mxu0 0.0
        %638 = vmatprep.subr.mxu0 0.0
        %639 = vmatpush1.msra.mxu0 0.0
        %640 = vmatprep.subr.mxu0 0.0
        %641 = vmatpush1.msra.mxu0 0.0
        %642 = vmatprep.subr.mxu0 0.0
        %643 = vmatpush1.msra.mxu0 0.0
        %644 = vmatprep.subr.mxu0 0.0
        %645 = vmatpush1.msra.mxu0 0.0
        %646 = vmatprep.subr.mxu0 0.0
        %647 = vmatpush1.msra.mxu0 0.0
        %648 = vmatprep.subr.mxu0 0.0
        %649 = vmatpush1.msra.mxu0 0.0
        %650 = vmatprep.subr.mxu0 0.0
        %651 = vmatpush1.msra.mxu0 0.0
        %652 = vmatprep.subr.mxu0 0.0
        %653 = vmatpush1.msra.mxu0 0.0
        %654 = vmatprep.mubr.f32.mxu0 0.0
        %655 = vmatmul.mubr.f32.gmra.mrb[0].mxu0 %v558
        %v656 = vpop.f32.mrb[0].mxu0
        %v657 = vadd.f32 0.0, %v656
        %v658 = vpop.f32.mrb[0].mxu0
        %659 = vmatprep.mubr.f32.mxu0 0.0
        %660 = vmatmul.mubr.f32.gmra.mrb[0].mxu0 %v559
        %v661 = vpop.f32.mrb[0].mxu0
        %v662 = vadd.f32 0.0, %v661
        %v663 = vpop.f32.mrb[0].mxu0
        %664 = vmatprep.mubr.f32.mxu0 0.0
        %665 = vmatmul.mubr.f32.gmra.mrb[0].mxu0 %v560
        %v666 = vpop.f32.mrb[0].mxu0
        %v667 = vadd.f32 0.0, %v666
        %v668 = vpop.f32.mrb[0].mxu0
        %669 = vmatprep.mubr.f32.mxu0 0.0
        %670 = vmatmul.mubr.f32.gmra.mrb[0].mxu0 %v561
        %v671 = vpop.f32.mrb[0].mxu0
        %v672 = vadd.f32 0.0, %v671
        %v673 = vpop.f32.mrb[0].mxu0
        %674 = vmatprep.mubr.f32.mxu0 0.0
        %675 = vmatmul.mubr.f32.gmra.mrb[0].mxu0 %v562
        %v676 = vpop.f32.mrb[0].mxu0
        %v677 = vadd.f32 0.0, %v676
        %v678 = vpop.f32.mrb[0].mxu0
        %679 = vmatprep.mubr.f32.mxu0 0.0
        %680 = vmatmul.mubr.f32.gmra.mrb[0].mxu0 %v563
        %v681 = vpop.f32.mrb[0].mxu0
        %v682 = vadd.f32 0.0, %v681
        %v683 = vpop.f32.mrb[0].mxu0
        %684 = vmatprep.mubr.f32.mxu0 0.0
        %685 = vmatmul.mubr.f32.gmra.mrb[0].mxu0 %v564
        %v686 = vpop.f32.mrb[0].mxu0
        %v687 = vadd.f32 0.0, %v686
        %v688 = vpop.f32.mrb[0].mxu0
        %689 = vmatprep.mubr.f32.mxu0 0.0
        %690 = vmatmul.mubr.f32.gmra.mrb[0].mxu0 %v565
        %v691 = vpop.f32.mrb[0].mxu0
        %v692 = vadd.f32 0.0, %v691
        %v693 = vpop.f32.mrb[0].mxu0
        %694 = vmatprep.mubr.f32.mxu0 0.0
        %695 = vmatmul.mubr.f32.gmra.mrb[0].mxu0 %v566
        %v696 = vpop.f32.mrb[0].mxu0
        %v697 = vadd.f32 0.0, %v696
        %v698 = vpop.f32.mrb[0].mxu0
        %699 = vmatprep.mubr.f32.mxu0 0.0
        %700 = vmatmul.mubr.f32.gmra.mrb[0].mxu0 %v567
        %v701 = vpop.f32.mrb[0].mxu0
        %v702 = vadd.f32 0.0, %v701
        %v703 = vpop.f32.mrb[0].mxu0
        %704 = vmatprep.mubr.f32.mxu0 0.0
        %705 = vmatmul.mubr.f32.gmra.mrb[0].mxu0 %v568
        %v706 = vpop.f32.mrb[0].mxu0
        %v707 = vadd.f32 0.0, %v706
        %v708 = vpop.f32.mrb[0].mxu0
        %709 = vmatprep.mubr.f32.mxu0 0.0
        %710 = vmatmul.mubr.f32.gmra.mrb[0].mxu0 %v569
        %v711 = vpop.f32.mrb[0].mxu0
        %v712 = vadd.f32 0.0, %v711
        %v713 = vpop.f32.mrb[0].mxu0
        %714 = vmatprep.mubr.f32.mxu0 0.0
        %715 = vmatmul.mubr.f32.gmra.mrb[0].mxu0 %v570
        %v716 = vpop.f32.mrb[0].mxu0
        %v717 = vadd.f32 0.0, %v716
        %v718 = vpop.f32.mrb[0].mxu0
        %719 = vmatprep.mubr.f32.mxu0 0.0
        %720 = vmatmul.mubr.f32.gmra.mrb[0].mxu0 %v571
        %v721 = vpop.f32.mrb[0].mxu0
        %v722 = vadd.f32 0.0, %v721
        %v723 = vpop.f32.mrb[0].mxu0
        %724 = vmatprep.mubr.f32.mxu0 0.0
        %725 = vmatmul.mubr.f32.gmra.mrb[0].mxu0 %v572
        %v726 = vpop.f32.mrb[0].mxu0
        %v727 = vadd.f32 0.0, %v726
        %v728 = vpop.f32.mrb[0].mxu0
        %729 = vmatprep.mubr.f32.mxu0 0.0
        %730 = vmatmul.mubr.f32.gmra.mrb[0].mxu0 %v573
        %v731 = vpop.f32.mrb[0].mxu0
        %v732 = vadd.f32 0.0, %v731
        %v733 = vpop.f32.mrb[0].mxu0
        %734 = vdwg.mxu0
        %v735 = vmax.f32 %v657, 0.0
        %v736 = vmax.f32 %v662, 0.0
        %v737 = vmax.f32 %v667, 0.0
        %v738 = vmax.f32 %v672, 0.0
        %v739 = vmax.f32 %v677, 0.0
        %v740 = vmax.f32 %v682, 0.0
        %v741 = vmax.f32 %v687, 0.0
        %v742 = vmax.f32 %v692, 0.0
        %v743 = vmax.f32 %v697, 0.0
        %v744 = vmax.f32 %v702, 0.0
        %v745 = vmax.f32 %v707, 0.0
        %v746 = vmax.f32 %v712, 0.0
        %v747 = vmax.f32 %v717, 0.0
        %v748 = vmax.f32 %v722, 0.0
        %v749 = vmax.f32 %v727, 0.0
        %v750 = vmax.f32 %v732, 0.0
        %751 = vmatprep.subr.mxu0 0.0
        %752 = vmatpush1.msra.mxu0 %v735
        %753 = vmatprep.subr.mxu0 0.0
        %754 = vmatpush1.msra.mxu0 %v736
        %755 = vmatprep.subr.mxu0 0.0
        %756 = vmatpush1.msra.mxu0 %v737
        %757 = vmatprep.subr.mxu0 0.0
        %758 = vmatpush1.msra.mxu0 %v738
        %759 = vmatprep.subr.mxu0 0.0
        %760 = vmatpush1.msra.mxu0 %v739
        %761 = vmatprep.subr.mxu0 0.0
        %762 = vmatpush1.msra.mxu0 %v740
        %763 = vmatprep.subr.mxu0 0.0
        %764 = vmatpush1.msra.mxu0 %v741
        %765 = vmatprep.subr.mxu0 0.0
        %766 = vmatpush1.msra.mxu0 %v742
        %767 = vmatprep.subr.mxu0 0.0
        %768 = vmatpush1.msra.mxu0 %v743
        %769 = vmatprep.subr.mxu0 0.0
        %770 = vmatpush1.msra.mxu0 %v744
        %771 = vmatprep.subr.mxu0 0.0
        %772 = vmatpush1.msra.mxu0 %v745
        %773 = vmatprep.subr.mxu0 0.0
        %774 = vmatpush1.msra.mxu0 %v746
        %775 = vmatprep.subr.mxu0 0.0
        %776 = vmatpush1.msra.mxu0 %v747
        %777 = vmatprep.subr.mxu0 0.0
        %778 = vmatpush1.msra.mxu0 %v748
        %779 = vmatprep.subr.mxu0 0.0
        %780 = vmatpush1.msra.mxu0 %v749
        %781 = vmatprep.subr.mxu0 0.0
        %782 = vmatpush1.msra.mxu0 %v750
        %783 = vmatprep.subr.mxu0 0.0
        %784 = vmatpush1.msra.mxu0 0.0
        %785 = vmatprep.subr.mxu0 0.0
        %786 = vmatpush1.msra.mxu0 0.0
        %787 = vmatprep.subr.mxu0 0.0
        %788 = vmatpush1.msra.mxu0 0.0
        %789 = vmatprep.subr.mxu0 0.0
        %790 = vmatpush1.msra.mxu0 0.0
        %791 = vmatprep.subr.mxu0 0.0
        %792 = vmatpush1.msra.mxu0 0.0
        %793 = vmatprep.subr.mxu0 0.0
        %794 = vmatpush1.msra.mxu0 0.0
        %795 = vmatprep.subr.mxu0 0.0
        %796 = vmatpush1.msra.mxu0 0.0
        %797 = vmatprep.subr.mxu0 0.0
        %798 = vmatpush1.msra.mxu0 0.0
        %799 = vmatprep.subr.mxu0 0.0
        %800 = vmatpush1.msra.mxu0 0.0
        %801 = vmatprep.subr.mxu0 0.0
        %802 = vmatpush1.msra.mxu0 0.0
        %803 = vmatprep.subr.mxu0 0.0
        %804 = vmatpush1.msra.mxu0 0.0
        %805 = vmatprep.subr.mxu0 0.0
        %806 = vmatpush1.msra.mxu0 0.0
        %807 = vmatprep.subr.mxu0 0.0
        %808 = vmatpush1.msra.mxu0 0.0
        %809 = vmatprep.subr.mxu0 0.0
        %810 = vmatpush1.msra.mxu0 0.0
        %811 = vmatprep.subr.mxu0 0.0
        %812 = vmatpush1.msra.mxu0 0.0
        %813 = vmatprep.subr.mxu0 0.0
        %814 = vmatpush1.msra.mxu0 0.0
        %815 = vmatprep.mubr.f32.mxu0 0.0
        %816 = vmatmul.mubr.f32.gmra.mrb[0].mxu0 %v301
        %v817 = vpop.f32.mrb[0].mxu0
        %v818 = vadd.f32 0.0, %v817
        %v819 = vpop.f32.mrb[0].mxu0
        %820 = vmatprep.mubr.f32.mxu0 0.0
        %821 = vmatmul.mubr.f32.gmra.mrb[0].mxu0 %v302
        %v822 = vpop.f32.mrb[0].mxu0
        %v823 = vadd.f32 0.0, %v822
        %v824 = vpop.f32.mrb[0].mxu0
        %825 = vmatprep.mubr.f32.mxu0 0.0
        %826 = vmatmul.mubr.f32.gmra.mrb[0].mxu0 %v303
        %v827 = vpop.f32.mrb[0].mxu0
        %v828 = vadd.f32 0.0, %v827
        %v829 = vpop.f32.mrb[0].mxu0
        %830 = vmatprep.mubr.f32.mxu0 0.0
        %831 = vmatmul.mubr.f32.gmra.mrb[0].mxu0 %v304
        %v832 = vpop.f32.mrb[0].mxu0
        %v833 = vadd.f32 0.0, %v832
        %v834 = vpop.f32.mrb[0].mxu0
        %835 = vmatprep.mubr.f32.mxu0 0.0
        %836 = vmatmul.mubr.f32.gmra.mrb[0].mxu0 %v305
        %v837 = vpop.f32.mrb[0].mxu0
        %v838 = vadd.f32 0.0, %v837
        %v839 = vpop.f32.mrb[0].mxu0
        %840 = vmatprep.mubr.f32.mxu0 0.0
        %841 = vmatmul.mubr.f32.gmra.mrb[0].mxu0 %v306
        %v842 = vpop.f32.mrb[0].mxu0
        %v843 = vadd.f32 0.0, %v842
        %v844 = vpop.f32.mrb[0].mxu0
        %845 = vmatprep.mubr.f32.mxu0 0.0
        %846 = vmatmul.mubr.f32.gmra.mrb[0].mxu0 %v307
        %v847 = vpop.f32.mrb[0].mxu0
        %v848 = vadd.f32 0.0, %v847
        %v849 = vpop.f32.mrb[0].mxu0
        %850 = vmatprep.mubr.f32.mxu0 0.0
        %851 = vmatmul.mubr.f32.gmra.mrb[0].mxu0 %v308
        %v852 = vpop.f32.mrb[0].mxu0
        %v853 = vadd.f32 0.0, %v852
        %v854 = vpop.f32.mrb[0].mxu0
        %855 = vmatprep.mubr.f32.mxu0 0.0
        %856 = vmatmul.mubr.f32.gmra.mrb[0].mxu0 %v309
        %v857 = vpop.f32.mrb[0].mxu0
        %v858 = vadd.f32 0.0, %v857
        %v859 = vpop.f32.mrb[0].mxu0
        %860 = vmatprep.mubr.f32.mxu0 0.0
        %861 = vmatmul.mubr.f32.gmra.mrb[0].mxu0 %v310
        %v862 = vpop.f32.mrb[0].mxu0
        %v863 = vadd.f32 0.0, %v862
        %v864 = vpop.f32.mrb[0].mxu0
        %865 = vmatprep.mubr.f32.mxu0 0.0
        %866 = vmatmul.mubr.f32.gmra.mrb[0].mxu0 %v311
        %v867 = vpop.f32.mrb[0].mxu0
        %v868 = vadd.f32 0.0, %v867
        %v869 = vpop.f32.mrb[0].mxu0
        %870 = vmatprep.mubr.f32.mxu0 0.0
        %871 = vmatmul.mubr.f32.gmra.mrb[0].mxu0 %v312
        %v872 = vpop.f32.mrb[0].mxu0
        %v873 = vadd.f32 0.0, %v872
        %v874 = vpop.f32.mrb[0].mxu0
        %875 = vmatprep.mubr.f32.mxu0 0.0
        %876 = vmatmul.mubr.f32.gmra.mrb[0].mxu0 %v313
        %v877 = vpop.f32.mrb[0].mxu0
        %v878 = vadd.f32 0.0, %v877
        %v879 = vpop.f32.mrb[0].mxu0
        %880 = vmatprep.mubr.f32.mxu0 0.0
        %881 = vmatmul.mubr.f32.gmra.mrb[0].mxu0 %v314
        %v882 = vpop.f32.mrb[0].mxu0
        %v883 = vadd.f32 0.0, %v882
        %v884 = vpop.f32.mrb[0].mxu0
        %885 = vmatprep.mubr.f32.mxu0 0.0
        %886 = vmatmul.mubr.f32.gmra.mrb[0].mxu0 %v315
        %v887 = vpop.f32.mrb[0].mxu0
        %v888 = vadd.f32 0.0, %v887
        %v889 = vpop.f32.mrb[0].mxu0
        %890 = vmatprep.mubr.f32.mxu0 0.0
        %891 = vmatmul.mubr.f32.gmra.mrb[0].mxu0 %v316
        %v892 = vpop.f32.mrb[0].mxu0
        %v893 = vadd.f32 0.0, %v892
        %v894 = vpop.f32.mrb[0].mxu0
        %895 = vdwg.mxu0
        %v896 = vmul.f32 %v818, %v381
        %v897 = vmul.f32 %v823, %v382
        %v898 = vmul.f32 %v828, %v383
        %v899 = vmul.f32 %v833, %v384
        %v900 = vmul.f32 %v838, %v385
        %v901 = vmul.f32 %v843, %v386
        %v902 = vmul.f32 %v848, %v387
        %v903 = vmul.f32 %v853, %v388
        %v904 = vmul.f32 %v858, %v389
        %v905 = vmul.f32 %v863, %v390
        %v906 = vmul.f32 %v868, %v391
        %v907 = vmul.f32 %v873, %v392
        %v908 = vmul.f32 %v878, %v393
        %v909 = vmul.f32 %v883, %v394
        %v910 = vmul.f32 %v888, %v395
        %v911 = vmul.f32 %v893, %v396
        %v912 = vld [vmem:[#allocation8] sm:$0xff]
        %v913 = vld [vmem:[#allocation8 + $0x8] sm:$0xff]
        %v914 = vld [vmem:[#allocation8 + $0x10] sm:$0xff]
        %v915 = vld [vmem:[#allocation8 + $0x18] sm:$0xff]
        %v916 = vld [vmem:[#allocation8 + $0x20] sm:$0xff]
        %v917 = vld [vmem:[#allocation8 + $0x28] sm:$0xff]
        %v918 = vld [vmem:[#allocation8 + $0x30] sm:$0xff]
        %v919 = vld [vmem:[#allocation8 + $0x38] sm:$0xff]
        %v920 = vld [vmem:[#allocation8 + $0x40] sm:$0xff]
        %v921 = vld [vmem:[#allocation8 + $0x48] sm:$0xff]
        %v922 = vld [vmem:[#allocation8 + $0x50] sm:$0xff]
        %v923 = vld [vmem:[#allocation8 + $0x58] sm:$0xff]
        %v924 = vld [vmem:[#allocation8 + $0x60] sm:$0xff]
        %v925 = vld [vmem:[#allocation8 + $0x68] sm:$0xff]
        %v926 = vld [vmem:[#allocation8 + $0x70] sm:$0xff]
        %v927 = vld [vmem:[#allocation8 + $0x78] sm:$0xff]
        %928 = vmatprep.subr.mxu0 0.0
        %929 = vmatpush1.msra.mxu0 %v912
        %930 = vmatprep.subr.mxu0 0.0
        %931 = vmatpush1.msra.mxu0 %v913
        %932 = vmatprep.subr.mxu0 0.0
        %933 = vmatpush1.msra.mxu0 %v914
        %934 = vmatprep.subr.mxu0 0.0
        %935 = vmatpush1.msra.mxu0 %v915
        %936 = vmatprep.subr.mxu0 0.0
        %937 = vmatpush1.msra.mxu0 %v916
        %938 = vmatprep.subr.mxu0 0.0
        %939 = vmatpush1.msra.mxu0 %v917
        %940 = vmatprep.subr.mxu0 0.0
        %941 = vmatpush1.msra.mxu0 %v918
        %942 = vmatprep.subr.mxu0 0.0
        %943 = vmatpush1.msra.mxu0 %v919
        %944 = vmatprep.subr.mxu0 0.0
        %945 = vmatpush1.msra.mxu0 %v920
        %946 = vmatprep.subr.mxu0 0.0
        %947 = vmatpush1.msra.mxu0 %v921
        %948 = vmatprep.subr.mxu0 0.0
        %949 = vmatpush1.msra.mxu0 %v922
        %950 = vmatprep.subr.mxu0 0.0
        %951 = vmatpush1.msra.mxu0 %v923
        %952 = vmatprep.subr.mxu0 0.0
        %953 = vmatpush1.msra.mxu0 %v924
        %954 = vmatprep.subr.mxu0 0.0
        %955 = vmatpush1.msra.mxu0 %v925
        %956 = vmatprep.subr.mxu0 0.0
        %957 = vmatpush1.msra.mxu0 %v926
        %958 = vmatprep.subr.mxu0 0.0
        %959 = vmatpush1.msra.mxu0 %v927
        %960 = vmatprep.subr.mxu0 0.0
        %961 = vmatpush1.msra.mxu0 0.0
        %962 = vmatprep.subr.mxu0 0.0
        %963 = vmatpush1.msra.mxu0 0.0
        %964 = vmatprep.subr.mxu0 0.0
        %965 = vmatpush1.msra.mxu0 0.0
        %966 = vmatprep.subr.mxu0 0.0
        %967 = vmatpush1.msra.mxu0 0.0
        %968 = vmatprep.subr.mxu0 0.0
        %969 = vmatpush1.msra.mxu0 0.0
        %970 = vmatprep.subr.mxu0 0.0
        %971 = vmatpush1.msra.mxu0 0.0
        %972 = vmatprep.subr.mxu0 0.0
        %973 = vmatpush1.msra.mxu0 0.0
        %974 = vmatprep.subr.mxu0 0.0
        %975 = vmatpush1.msra.mxu0 0.0
        %976 = vmatprep.subr.mxu0 0.0
        %977 = vmatpush1.msra.mxu0 0.0
        %978 = vmatprep.subr.mxu0 0.0
        %979 = vmatpush1.msra.mxu0 0.0
        %980 = vmatprep.subr.mxu0 0.0
        %981 = vmatpush1.msra.mxu0 0.0
        %982 = vmatprep.subr.mxu0 0.0
        %983 = vmatpush1.msra.mxu0 0.0
        %984 = vmatprep.subr.mxu0 0.0
        %985 = vmatpush1.msra.mxu0 0.0
        %986 = vmatprep.subr.mxu0 0.0
        %987 = vmatpush1.msra.mxu0 0.0
        %988 = vmatprep.subr.mxu0 0.0
        %989 = vmatpush1.msra.mxu0 0.0
        %990 = vmatprep.subr.mxu0 0.0
        %991 = vmatpush1.msra.mxu0 0.0
        %992 = vmatprep.mubr.f32.mxu0 0.0
        %993 = vmatmul.mubr.f32.gmra.mrb[0].mxu0 %v896
        %v994 = vpop.f32.mrb[0].mxu0
        %v995 = vadd.f32 0.0, %v994
        %v996 = vpop.f32.mrb[0].mxu0
        %997 = vmatprep.mubr.f32.mxu0 0.0
        %998 = vmatmul.mubr.f32.gmra.mrb[0].mxu0 %v897
        %v999 = vpop.f32.mrb[0].mxu0
        %v1000 = vadd.f32 0.0, %v999
        %v1001 = vpop.f32.mrb[0].mxu0
        %1002 = vmatprep.mubr.f32.mxu0 0.0
        %1003 = vmatmul.mubr.f32.gmra.mrb[0].mxu0 %v898
        %v1004 = vpop.f32.mrb[0].mxu0
        %v1005 = vadd.f32 0.0, %v1004
        %v1006 = vpop.f32.mrb[0].mxu0
        %1007 = vmatprep.mubr.f32.mxu0 0.0
        %1008 = vmatmul.mubr.f32.gmra.mrb[0].mxu0 %v899
        %v1009 = vpop.f32.mrb[0].mxu0
        %v1010 = vadd.f32 0.0, %v1009
        %v1011 = vpop.f32.mrb[0].mxu0
        %1012 = vmatprep.mubr.f32.mxu0 0.0
        %1013 = vmatmul.mubr.f32.gmra.mrb[0].mxu0 %v900
        %v1014 = vpop.f32.mrb[0].mxu0
        %v1015 = vadd.f32 0.0, %v1014
        %v1016 = vpop.f32.mrb[0].mxu0
        %1017 = vmatprep.mubr.f32.mxu0 0.0
        %1018 = vmatmul.mubr.f32.gmra.mrb[0].mxu0 %v901
        %v1019 = vpop.f32.mrb[0].mxu0
        %v1020 = vadd.f32 0.0, %v1019
        %v1021 = vpop.f32.mrb[0].mxu0
        %1022 = vmatprep.mubr.f32.mxu0 0.0
        %1023 = vmatmul.mubr.f32.gmra.mrb[0].mxu0 %v902
        %v1024 = vpop.f32.mrb[0].mxu0
        %v1025 = vadd.f32 0.0, %v1024
        %v1026 = vpop.f32.mrb[0].mxu0
        %1027 = vmatprep.mubr.f32.mxu0 0.0
        %1028 = vmatmul.mubr.f32.gmra.mrb[0].mxu0 %v903
        %v1029 = vpop.f32.mrb[0].mxu0
        %v1030 = vadd.f32 0.0, %v1029
        %v1031 = vpop.f32.mrb[0].mxu0
        %1032 = vmatprep.mubr.f32.mxu0 0.0
        %1033 = vmatmul.mubr.f32.gmra.mrb[0].mxu0 %v904
        %v1034 = vpop.f32.mrb[0].mxu0
        %v1035 = vadd.f32 0.0, %v1034
        %v1036 = vpop.f32.mrb[0].mxu0
        %1037 = vmatprep.mubr.f32.mxu0 0.0
        %1038 = vmatmul.mubr.f32.gmra.mrb[0].mxu0 %v905
        %v1039 = vpop.f32.mrb[0].mxu0
        %v1040 = vadd.f32 0.0, %v1039
        %v1041 = vpop.f32.mrb[0].mxu0
        %1042 = vmatprep.mubr.f32.mxu0 0.0
        %1043 = vmatmul.mubr.f32.gmra.mrb[0].mxu0 %v906
        %v1044 = vpop.f32.mrb[0].mxu0
        %v1045 = vadd.f32 0.0, %v1044
        %v1046 = vpop.f32.mrb[0].mxu0
        %1047 = vmatprep.mubr.f32.mxu0 0.0
        %1048 = vmatmul.mubr.f32.gmra.mrb[0].mxu0 %v907
        %v1049 = vpop.f32.mrb[0].mxu0
        %v1050 = vadd.f32 0.0, %v1049
        %v1051 = vpop.f32.mrb[0].mxu0
        %1052 = vmatprep.mubr.f32.mxu0 0.0
        %1053 = vmatmul.mubr.f32.gmra.mrb[0].mxu0 %v908
        %v1054 = vpop.f32.mrb[0].mxu0
        %v1055 = vadd.f32 0.0, %v1054
        %v1056 = vpop.f32.mrb[0].mxu0
        %1057 = vmatprep.mubr.f32.mxu0 0.0
        %1058 = vmatmul.mubr.f32.gmra.mrb[0].mxu0 %v909
        %v1059 = vpop.f32.mrb[0].mxu0
        %v1060 = vadd.f32 0.0, %v1059
        %v1061 = vpop.f32.mrb[0].mxu0
        %1062 = vmatprep.mubr.f32.mxu0 0.0
        %1063 = vmatmul.mubr.f32.gmra.mrb[0].mxu0 %v910
        %v1064 = vpop.f32.mrb[0].mxu0
        %v1065 = vadd.f32 0.0, %v1064
        %v1066 = vpop.f32.mrb[0].mxu0
        %1067 = vmatprep.mubr.f32.mxu0 0.0
        %1068 = vmatmul.mubr.f32.gmra.mrb[0].mxu0 %v911
        %v1069 = vpop.f32.mrb[0].mxu0
        %v1070 = vadd.f32 0.0, %v1069
        %v1071 = vpop.f32.mrb[0].mxu0
        %1072 = vdwg.mxu0
        %v1073 = vmax.f32 %v995, 0.0
        %v1074 = vmax.f32 %v1000, 0.0
        %v1075 = vmax.f32 %v1005, 0.0
        %v1076 = vmax.f32 %v1010, 0.0
        %v1077 = vmax.f32 %v1015, 0.0
        %v1078 = vmax.f32 %v1020, 0.0
        %v1079 = vmax.f32 %v1025, 0.0
        %v1080 = vmax.f32 %v1030, 0.0
        %v1081 = vmax.f32 %v1035, 0.0
        %v1082 = vmax.f32 %v1040, 0.0
        %v1083 = vmax.f32 %v1045, 0.0
        %v1084 = vmax.f32 %v1050, 0.0
        %v1085 = vmax.f32 %v1055, 0.0
        %v1086 = vmax.f32 %v1060, 0.0
        %v1087 = vmax.f32 %v1065, 0.0
        %v1088 = vmax.f32 %v1070, 0.0
        %1089 = vst [vmem:[%s284] sm:$0xff] %v1073
        %1090 = vst [vmem:[%s284 + $0x8] sm:$0xff] %v1074
        %1091 = vst [vmem:[%s284 + $0x10] sm:$0xff] %v1075
        %1092 = vst [vmem:[%s284 + $0x18] sm:$0xff] %v1076
        %1093 = vst [vmem:[%s284 + $0x20] sm:$0xff] %v1077
        %1094 = vst [vmem:[%s284 + $0x28] sm:$0xff] %v1078
        %1095 = vst [vmem:[%s284 + $0x30] sm:$0xff] %v1079
        %1096 = vst [vmem:[%s284 + $0x38] sm:$0xff] %v1080
        %1097 = vst [vmem:[%s284 + $0x40] sm:$0xff] %v1081
        %1098 = vst [vmem:[%s284 + $0x48] sm:$0xff] %v1082
        %1099 = vst [vmem:[%s284 + $0x50] sm:$0xff] %v1083
        %1100 = vst [vmem:[%s284 + $0x58] sm:$0xff] %v1084
        %1101 = vst [vmem:[%s284 + $0x60] sm:$0xff] %v1085
        %1102 = vst [vmem:[%s284 + $0x68] sm:$0xff] %v1086
        %1103 = vst [vmem:[%s284 + $0x70] sm:$0xff] %v1087
        %1104 = vst [vmem:[%s284 + $0x78] sm:$0xff] %v1088
        %s1105 = sand.u32 %s127, 1
        %s1106 = scalar_lea.sflag [#allocation4], %s1105
        %s1107 = sand.u32 %s127, 1
        %s1108 = smul.addr %s1107, 128
        %s1109 = scalar_lea.vmem [#allocation10], %s1108
        // Predicated region
        $region53: #{tpu_custom_call.1} parent=35 // pred_check
          %p1110 = pneg %p137
        $region54: #{tpu_custom_call.1} parent=35 // pred_check_branch
          %1112 = sbr.rel (%p1110) target = $region56
        $region55: #{tpu_custom_call.1} parent=35 // pred_region
          %s1114 = ssub.s32 2048, 2048
          %1115 = vsyncadd %s1106, %s1114
          %s1116 = smul.addr %s25, 16
          %s1117 = smul.addr %s1116, 128
          %s1118 = scalar_lea.hbm %s4, %s1117
          %s1119 = sshll.u32 %s1109, 4
          %s1120 = int_to_ptr.vmem [resolvable:$true] %s1119
          %1125 = dma.vmem_to_hbm [thread:$0]  %s1120, 2048, %s1118, %s1106, 128, 128, 8
        $region56: #{tpu_custom_call.1} parent=35 // pred_fallthru
          _
      $region36: #{tpu_custom_call.1} parent=5 // pred_fallthru
        _
      %p1126 = scmp.le.s32.totalorder 2, %s20
      // Predicated region
      $region57: #{tpu_custom_call.1} parent=5 // pred_check
        %p1127 = pneg %p1126
      $region58: #{tpu_custom_call.1} parent=5 // pred_check_branch
        %1129 = sbr.rel (%p1127) target = $region60
      $region59: #{tpu_custom_call.1} parent=5 // pred_region
        %s1130 = ssub.s32 %s20, 2
        // Predicated region
        $region61: #{tpu_custom_call.1} parent=59 // pred_check
          %p1131 = pneg %p143
        $region62: #{tpu_custom_call.1} parent=59 // pred_check_branch
          %1133 = sbr.rel (%p1131) target = $region64
        $region63: #{tpu_custom_call.1} parent=59 // pred_region
          %s1134 = sand.u32 %s128, 1
          %s1135 = scalar_lea.sflag [#allocation4], %s1134
          %s1136 = sand.u32 %s128, 1
          %s1137 = smul.addr %s1136, 128
          %s1138 = scalar_lea.vmem [#allocation10], %s1137
          %1139 = dma.done %s1135, 2048
        $region64: #{tpu_custom_call.1} parent=59 // pred_fallthru
          _
      $region60: #{tpu_custom_call.1} parent=5 // pred_fallthru
        _
    $region6: #{tpu_custom_call.1} parent=1 // loop_footer
      %s24 = sadd.s32 1, %s20
    $region7: #{tpu_custom_call.1} parent=1 // loop_footer_branch
      %19 = sbr.rel target = $region3
    $region8: #{tpu_custom_call.1} parent=1 // loop_exit
      _
    %1140 = vsyncpa [#allocation3], 1
    %s1141 = scalar_lea.sflag [#allocation3], 1
    %1142 = vsyncpa %s1141, 1
    %1143 = vsyncpa [#allocation6], 1
    %s1144 = scalar_lea.sflag [#allocation6], 1
    %1145 = vsyncpa %s1144, 1
    %1146 = vsyncpa [#allocation9], 1
    %1147 = vsyncpa [#allocation4], 1
    %s1148 = scalar_lea.sflag [#allocation4], 1
    %1149 = vsyncpa %s1148, 1

</llo_original>
